<compile_context>
chip_gen: v5e
topology: v5e:2x2
jax: 0.10.0
libtpu: 0.0.40
codegen_flags: <defaults>
</compile_context>

<pallas_src>
import jax
import jax.numpy as jnp
from jax import lax
from jax.experimental import pallas as pl
from jax.experimental.pallas import tpu as pltpu

EPS = 1e-6


# ----------------------------- kernels -----------------------------

def _ln2d_kernel_batched(x_ref, w_ref, b_ref, o_ref):
    """Block = (tb, C, HW); normalize over axis=1 (channels)."""
    x = x_ref[...].astype(jnp.float32)                               # (tb, C, HW)
    mean = jnp.mean(x, axis=1, keepdims=True)                        # (tb, 1, HW)
    centered = x - mean
    var = jnp.mean(centered * centered, axis=1, keepdims=True)       # biased, like torch
    inv = lax.rsqrt(var + EPS)
    w = w_ref[...].astype(jnp.float32)                               # (1, C, 1)
    b = b_ref[...].astype(jnp.float32)                               # (1, C, 1)
    o_ref[...] = (centered * inv * w + b).astype(o_ref.dtype)


def _pick_lane_chunk(tile_hw):
    """Largest lane-chunk that evenly divides the tile (keeps temps in vregs)."""
    for c in (4096, 2048, 1024):
        if tile_hw > c and tile_hw % c == 0:
            return c
    return tile_hw


def _ln2d_kernel_hw(x_ref, w_ref, b_ref, o_ref):
    """Block = (1, C, tile_hw); normalize over the sublane (C) axis."""
    tile_hw = x_ref.shape[2]
    # Hoist weight/bias loads out of the chunk loop (no re-broadcast per chunk).
    w = w_ref[0].astype(jnp.float32)                                 # (C, 1)
    b = b_ref[0].astype(jnp.float32)                                 # (C, 1)

    def compute(off, size):
        x = x_ref[0, :, pl.ds(off, size)].astype(jnp.float32)        # (C, size)
        mean = jnp.mean(x, axis=0, keepdims=True)                    # (1, size)
        centered = x - mean
        var = jnp.mean(centered * centered, axis=0, keepdims=True)   # biased, like torch
        inv = lax.rsqrt(var + EPS)
        o_ref[0, :, pl.ds(off, size)] = (centered * inv * w + b).astype(o_ref.dtype)

    chunk = _pick_lane_chunk(tile_hw)
    n_chunks = tile_hw // chunk
    if n_chunks == 1:
        compute(0, tile_hw)
    else:
        def body(i, carry):
            compute(pl.multiple_of(i * chunk, 128), chunk)
            return carry
        lax.fori_loop(0, n_chunks, body, 0, unroll=True)


# ----------------------------- sizing helpers -----------------------------

def _round_up(x, m):
    return -(-x // m) * m


def _sublane_pack(dtype):
    # f32 -> 8, bf16 -> 16, int8 -> 32 sublanes per packed 32-bit row.
    return 8 * max(1, 4 // jnp.dtype(dtype).itemsize)


def _vmem_capacity_bytes():
    try:
        return int(pltpu.get_tpu_info().vmem_capacity_bytes)
    except Exception:
        return 64 << 20          # conservative (v7x-sized) fallback


def _snap_to_divisor(total, tile):
    """Largest multiple of 128 in (tile/2, tile] dividing `total`; else tile."""
    t = max(128, (tile // 128) * 128)
    lo = max(128, t // 2)
    cand = t
    while cand >= lo:
        if total % cand == 0:
            return cand
        cand -= 128
    return t


# ----------------------------- wrapper -----------------------------

def layernorm2d(x_nchw, weight, bias, *, tile_hw=None, batch_tile=None):
    """Pallas equivalent of the PyTorch LayerNorm2d.forward on NCHW input."""
    B, C, H, W = x_nchw.shape
    HW = H * W
    itemsize = jnp.dtype(x_nchw.dtype).itemsize
    c_pad = _round_up(C, _sublane_pack(x_nchw.dtype))   # physical sublane rows
    hw_pad = _round_up(HW, 128)                         # physical lanes

    cap = _vmem_capacity_bytes()
    # Traffic target per grid step (input-block bytes): past the ~1 MiB
    # pipeline knee everywhere; larger on v7x (64 MiB VMEM, 3.2 TB/s HBM).
    target_block = (4 << 20) if cap <= (64 << 20) else (2 << 20)
    # Budget for double-buffered in+out blocks plus f32 temporaries.
    block_budget = min(cap // 3, 24 << 20)
    # Bytes per lane-column: 2x double-buffered input + 2x output blocks,
    # plus ~3 f32 intermediates (conservative: assumes no chunking).
    per_lane = c_pad * (4 * itemsize + 3 * 4)

    x3 = x_nchw.reshape(B, C, HW)       # free: NCHW is already contiguous this way
    w3 = weight.reshape(1, C, 1)
    b3 = bias.reshape(1, C, 1)

    image_io_bytes = c_pad * hw_pad * itemsize
    use_spatial = (tile_hw is not None) or (image_io_bytes > target_block // 2)

    if not use_spatial:
        # ---- small feature maps: block the batch axis ----
        if batch_tile is None:
            tb = max(1, target_block // max(image_io_bytes, 1))
            tb = min(tb, max(1, block_budget // max(per_lane * hw_pad, 1)))
            tb = min(tb, B)
            if B >= 2:                       # keep >=2 grid steps for v7x's 2 TCs
                tb = min(tb, _round_up(B, 2) // 2)
        else:
            tb = max(1, min(batch_tile, B))
        grid = (pl.cdiv(B, tb),)
        needed = tb * hw_pad * per_lane + 4 * c_pad * 128 * 4
        kernel = _ln2d_kernel_batched
        in_specs = [
            pl.BlockSpec((tb, C, HW), lambda i: (i, 0, 0)),
            pl.BlockSpec((1, C, 1), lambda i: (0, 0, 0)),   # resident across steps
            pl.BlockSpec((1, C, 1), lambda i: (0, 0, 0)),
        ]
        out_specs = pl.BlockSpec((tb, C, HW), lambda i: (i, 0, 0))
        dim_sem = ("parallel",)
    else:
        # ---- large feature maps: block the spatial axis ----
        if tile_hw is None:
            tile = target_block // max(c_pad * itemsize, 1)          # traffic-driven
            tile = min(tile, block_budget // max(per_lane, 1))       # VMEM-bounded
            tile = max(128, (tile // 128) * 128)
            if tile >= HW:
                tile_hw = HW                 # full-extent block (always layout-legal)
            else:
                tile_hw = _snap_to_divisor(HW, tile)   # avoid ragged tail if possible
            # Make sure the grid has >=2 programs so both v7x cores get work.
            if B * pl.cdiv(HW, tile_hw) < 2 and HW >= 256:
                tile_hw = _round_up(_round_up(HW, 2) // 2, 128)
        n_hw = pl.cdiv(HW, tile_hw)
        grid = (B, n_hw)
        chunk = _pick_lane_chunk(tile_hw)
        needed = (4 * c_pad * itemsize * _round_up(tile_hw, 128)     # dbl-buf in+out
                  + 3 * 4 * c_pad * _round_up(chunk, 128)            # f32 chunk temps
                  + 4 * c_pad * 128 * 4)
        kernel = _ln2d_kernel_hw
        in_specs = [
            pl.BlockSpec((1, C, tile_hw), lambda b, j: (b, 0, j)),
            pl.BlockSpec((1, C, 1), lambda b, j: (0, 0, 0)),
            pl.BlockSpec((1, C, 1), lambda b, j: (0, 0, 0)),
        ]
        out_specs = pl.BlockSpec((1, C, tile_hw), lambda b, j: (b, 0, j))
        dim_sem = ("parallel", "parallel")

    # Explicit scoped-VMEM limit: at least what this tiling needs (+8 MiB
    # headroom), never more than half the chip's VMEM, 32 MiB floor (v5e's
    # default scoped limit is only 16 MiB).
    vmem_limit = int(min(max(cap // 2, 32 << 20),
                         max(32 << 20, needed + (8 << 20))))

    y3 = pl.pallas_call(
        kernel,
        out_shape=jax.ShapeDtypeStruct((B, C, HW), x_nchw.dtype),
        grid_spec=pltpu.PrefetchScalarGridSpec(
            num_scalar_prefetch=0,
            grid=grid,
            in_specs=in_specs,
            out_specs=out_specs,
        ),
        compiler_params=pltpu.CompilerParams(
            dimension_semantics=dim_sem,
            vmem_limit_bytes=vmem_limit,
        ),
    )(x3, w3, b3)
    return y3.reshape(B, C, H, W)


# ----------------------------- reference & test -----------------------------

def _reference(x_nchw, weight, bias):
    x = jnp.transpose(x_nchw, (0, 2, 3, 1)).astype(jnp.float32)
    mean = jnp.mean(x, axis=-1, keepdims=True)
    var = jnp.mean((x - mean) ** 2, axis=-1, keepdims=True)
    y = (x - mean) * lax.rsqrt(var + EPS) * weight + bias
    return jnp.transpose(y, (0, 3, 1, 2)).astype(x_nchw.dtype)


if __name__ == "__main__":
    key = jax.random.PRNGKey(0)
    kx, kw, kb, kx2, kx3 = jax.random.split(key, 5)

    B, C = 2, 4
    weight = jax.random.normal(kw, (C,), dtype=jnp.float32)
    bias = jax.random.normal(kb, (C,), dtype=jnp.float32)

    # Case 1: module-sized example -> batch-blocked path.
    x = jax.random.normal(kx, (B, C, 16, 16), dtype=jnp.float32)
    y = jax.block_until_ready(layernorm2d(x, weight, bias))
    y_ref = _reference(x, weight, bias)
    assert y.shape == x.shape
    assert jnp.allclose(y, y_ref, atol=1e-5, rtol=1e-5)

    # Case 2: non-multiple-of-128 spatial size with a forced small tile ->
    # spatial-tiled path with a masked ragged tail.
    x2 = jax.random.normal(kx2, (B, C, 13, 13), dtype=jnp.float32)
    y2 = jax.block_until_ready(layernorm2d(x2, weight, bias, tile_hw=128))
    y2_ref = _reference(x2, weight, bias)
    assert y2.shape == x2.shape
    assert jnp.allclose(y2, y2_ref, atol=1e-5, rtol=1e-5)

    # Case 3: forced full-extent spatial tile -> exercises the in-kernel
    # chunked (unrolled fori_loop) compute path.
    x3 = jax.random.normal(kx3, (1, C, 64, 64), dtype=jnp.float32)
    y3 = jax.block_until_ready(layernorm2d(x3, weight, bias, tile_hw=4096))
    y3_ref = _reference(x3, weight, bias)
    assert y3.shape == x3.shape
    assert jnp.allclose(y3, y3_ref, atol=1e-5, rtol=1e-5)

    print("KERNEL_OK")
</pallas_src>

<mosaic_0001>
module attributes {stable_mosaic.version = 11 : i64} {
  func.func @_ln2d_kernel_batched(%arg0: i32, %arg1: memref<1x4x256xf32, #tpu.memory_space<vmem>>, %arg2: memref<1x4x1xf32, #tpu.memory_space<vmem>>, %arg3: memref<1x4x1xf32, #tpu.memory_space<vmem>>, %arg4: memref<1x4x256xf32, #tpu.memory_space<vmem>>) attributes {dimension_semantics = [#tpu.dimension_semantics<parallel>], iteration_bounds = array<i64: 2>, scalar_prefetch = 0 : i64, scratch_operands = 0 : i64, tpu.core_type = #tpu.core_type<tc>, window_params = [{transform_indices = @transform_0, window_bounds = array<i64: 1, 4, 256>}, {pipeline_mode = #tpu.pipeline_mode<synchronous>, transform_indices = @transform_1, window_bounds = array<i64: 1, 4, 1>}, {pipeline_mode = #tpu.pipeline_mode<synchronous>, transform_indices = @transform_2, window_bounds = array<i64: 1, 4, 1>}, {transform_indices = @transform_3, window_bounds = array<i64: 1, 4, 256>}]} {
    %c0 = arith.constant 0 : index
    %c0_0 = arith.constant 0 : index
    %c0_1 = arith.constant 0 : index
    %0 = vector.load %arg1[%c0, %c0_0, %c0_1] : memref<1x4x256xf32, #tpu.memory_space<vmem>>, vector<1x4x256xf32>
    %cst = arith.constant dense<0.000000e+00> : vector<1x256xf32>
    %1 = vector.multi_reduction <add>, %0, %cst [1] : vector<1x4x256xf32> to vector<1x256xf32>
    %2 = vector.shape_cast %1 : vector<1x256xf32> to vector<1x1x256xf32>
    %cst_2 = arith.constant 4.000000e+00 : f32
    %3 = vector.broadcast %cst_2 : f32 to vector<1x1x256xf32>
    %4 = arith.divf %2, %3 : vector<1x1x256xf32>
    %5 = vector.broadcast %4 : vector<1x1x256xf32> to vector<1x4x256xf32>
    %6 = arith.subf %0, %5 : vector<1x4x256xf32>
    %7 = arith.mulf %6, %6 : vector<1x4x256xf32>
    %cst_3 = arith.constant dense<0.000000e+00> : vector<1x256xf32>
    %8 = vector.multi_reduction <add>, %7, %cst_3 [1] : vector<1x4x256xf32> to vector<1x256xf32>
    %9 = vector.shape_cast %8 : vector<1x256xf32> to vector<1x1x256xf32>
    %cst_4 = arith.constant 4.000000e+00 : f32
    %10 = vector.broadcast %cst_4 : f32 to vector<1x1x256xf32>
    %11 = arith.divf %9, %10 : vector<1x1x256xf32>
    %cst_5 = arith.constant 9.99999997E-7 : f32
    %12 = vector.broadcast %cst_5 : f32 to vector<1x1x256xf32>
    %13 = arith.addf %11, %12 : vector<1x1x256xf32>
    %14 = math.rsqrt %13 : vector<1x1x256xf32>
    %c0_6 = arith.constant 0 : index
    %c0_7 = arith.constant 0 : index
    %c0_8 = arith.constant 0 : index
    %15 = vector.load %arg2[%c0_6, %c0_7, %c0_8] : memref<1x4x1xf32, #tpu.memory_space<vmem>>, vector<1x4x1xf32>
    %c0_9 = arith.constant 0 : index
    %c0_10 = arith.constant 0 : index
    %c0_11 = arith.constant 0 : index
    %16 = vector.load %arg3[%c0_9, %c0_10, %c0_11] : memref<1x4x1xf32, #tpu.memory_space<vmem>>, vector<1x4x1xf32>
    %17 = vector.broadcast %14 : vector<1x1x256xf32> to vector<1x4x256xf32>
    %18 = arith.mulf %6, %17 : vector<1x4x256xf32>
    %19 = vector.broadcast %15 : vector<1x4x1xf32> to vector<1x4x256xf32>
    %20 = arith.mulf %18, %19 : vector<1x4x256xf32>
    %21 = vector.broadcast %16 : vector<1x4x1xf32> to vector<1x4x256xf32>
    %22 = arith.addf %20, %21 : vector<1x4x256xf32>
    %c0_12 = arith.constant 0 : index
    %c0_13 = arith.constant 0 : index
    %c0_14 = arith.constant 0 : index
    %23 = vector.load %arg4[%c0_12, %c0_13, %c0_14] : memref<1x4x256xf32, #tpu.memory_space<vmem>>, vector<1x4x256xf32>
    tpu.vector_store %arg4[%c0_12, %c0_13, %c0_14], %22 {strides = array<i32>} : memref<1x4x256xf32, #tpu.memory_space<vmem>>, vector<1x4x256xf32>,
    return
  }
  func.func @transform_0(%arg0: i32) -> (i32, i32, i32) {
    %c0_i32 = arith.constant 0 : i32
    %c0_i32_0 = arith.constant 0 : i32
    %c0_i32_1 = arith.constant 0 : i32
    return %arg0, %c0_i32, %c0_i32_0 : i32, i32, i32
  }
  func.func @transform_1(%arg0: i32) -> (i32, i32, i32) {
    %c0_i32 = arith.constant 0 : i32
    %c0_i32_0 = arith.constant 0 : i32
    %c0_i32_1 = arith.constant 0 : i32
    %c0_i32_2 = arith.constant 0 : i32
    return %c0_i32, %c0_i32_0, %c0_i32_1 : i32, i32, i32
  }
  func.func @transform_2(%arg0: i32) -> (i32, i32, i32) {
    %c0_i32 = arith.constant 0 : i32
    %c0_i32_0 = arith.constant 0 : i32
    %c0_i32_1 = arith.constant 0 : i32
    %c0_i32_2 = arith.constant 0 : i32
    return %c0_i32, %c0_i32_0, %c0_i32_1 : i32, i32, i32
  }
  func.func @transform_3(%arg0: i32) -> (i32, i32, i32) {
    %c0_i32 = arith.constant 0 : i32
    %c0_i32_0 = arith.constant 0 : i32
    %c0_i32_1 = arith.constant 0 : i32
    return %arg0, %c0_i32, %c0_i32_0 : i32, i32, i32
  }
}

</mosaic_0001>

<llo_original>
// kernel: tpu_custom_call.1
$region0: #{tpu_custom_call.1}
  #allocation0 [shape = 'u32[]', space=smem, size = 0x4, offset = 0x4, fixed_abs, tag = 'smem constant byte address 0x4 - core index']
  #allocation1 [shape = 'u32[72,128]{1,0:T(1,128)}', space=vmem, size = 0x9000, scoped, tag = 'internal scratch']
  %s0 = inlined_call_operand.hbm [shape: f32[2,4,256], index: 0, kind: input, shape index: {}]
  %s1 = inlined_call_operand.vmem [shape: f32[1,4,1], index: 1, kind: input, shape index: {}]
  %s2 = inlined_call_operand.vmem [shape: f32[1,4,1], index: 2, kind: input, shape index: {}]
  %s3 = inlined_call_operand.hbm [shape: f32[2,4,256], index: 3, kind: output, shape index: {}]
  %s4 = sld [smem:[#allocation0]]
  $region49: #{tpu_custom_call.1} parent=0
    _
  %s6 = ssub.s32 1, %s4
  %s7 = scalar_select 0, %s6, %s4
  $region1: #{tpu_custom_call.1} parent=0
    #allocation2 [shape = 'u8[8192]{0}', space=vmem, size = 0x2000, scoped, tag = 'input window, operand 0']
    #allocation3 [shape = 's32[2]{0}', space=sflag, size = 0x8, scoped, tag = 'scoped memory for tpu_custom_call.1']
    #allocation4 [shape = 's32[2]{0}', space=sflag, size = 0x8, scoped, tag = 'scoped memory for tpu_custom_call.1']
    #allocation5 [shape = 'u8[8192]{0}', space=vmem, size = 0x2000, scoped, tag = 'output window, operand 0']
    %8 = vsyncpa [#allocation3], 0
    %s9 = scalar_lea.sflag [#allocation3], 1
    %10 = vsyncpa %s9, 0
    %11 = vsyncpa [#allocation4], 0
    %s12 = scalar_lea.sflag [#allocation4], 1
    %13 = vsyncpa %s12, 0
    loop: start=0, step=1, limit=4
    $region2: #{tpu_custom_call.1} parent=1 // loop_pre_header
      _
    $region3: #{tpu_custom_call.1} parent=1 // loop_header
      %s15 = sphi 0, %s19
      %p16 = scmp.ge.s32.totalorder %s15, 4
      %s25 = sphi 0, %s27
      %s28 = sphi 0, %s25
      %s29 = sphi 0, %s28
      %s45 = sphi 0, %s29
      %s49 = sphi 0, %s49
      %s51 = sphi 0, %s49
      %s52 = sphi 0, %s51
      %s66 = sphi 0, %s52
      %s70 = sphi 0, %s70
      %s72 = sphi 0, %s70
      %s73 = sphi 0, %s72
      %s87 = sphi 0, %s73
      %s93 = sphi 0, %s95
      %s96 = sphi 0, %s93
      %s97 = sphi 0, %s96
      %s113 = sphi 0, %s97
    $region4: #{tpu_custom_call.1} parent=1 // loop_header_branch
      %18 = sbr.rel (%p16) target = $region8
    $region5: #{tpu_custom_call.1} parent=1 // loop_body
      %s20 = ssub.s32 %s15, 1
      %s21 = ssub.s32 %s15, 2
      %s22 = sadd.s32 %s15, 1
      %s23 = ssub.s32 %s15, %s22
      %p24 = scmp.eq.s32.totalorder %s23, 0
      %s26 = sadd.s32 %s25, 1
      %s27 = scalar_select %p24, %s25, %s26
      %p30 = pneg %p24
      %p31 = scmp.eq.s32.totalorder %s15, 1
      %p32 = por %p30, %p31
      %p33 = scmp.ne.s32.totalorder %s25, %s28
      %p34 = scmp.eq.s32.totalorder %s15, 0
      %p35 = por %p33, %p34
      %p36 = scmp.ne.s32.totalorder %s25, %s28
      %p37 = scmp.eq.s32.totalorder %s20, 1
      %p38 = por %p36, %p37
      %p39 = scmp.ne.s32.totalorder %s28, %s29
      %p40 = scmp.eq.s32.totalorder %s20, 0
      %p41 = por %p39, %p40
      %p42 = scmp.ne.s32.totalorder %s28, %s29
      %p43 = scmp.eq.s32.totalorder %s21, 1
      %p44 = por %p42, %p43
      %p46 = scmp.ne.s32.totalorder %s29, %s45
      %p47 = scmp.eq.s32.totalorder %s21, 0
      %p48 = por %p46, %p47
      %s50 = sadd.s32 %s49, 1
      %p53 = scmp.eq.s32.totalorder %s15, 1
      %p54 = scmp.ne.s32.totalorder %s49, %s51
      %p55 = scmp.eq.s32.totalorder %s15, 0
      %p56 = por %p54, %p55
      %p57 = scmp.ne.s32.totalorder %s49, %s51
      %p58 = scmp.eq.s32.totalorder %s20, 1
      %p59 = por %p57, %p58
      %p60 = scmp.ne.s32.totalorder %s51, %s52
      %p61 = scmp.eq.s32.totalorder %s20, 0
      %p62 = por %p60, %p61
      %p63 = scmp.ne.s32.totalorder %s51, %s52
      %p64 = scmp.eq.s32.totalorder %s21, 1
      %p65 = por %p63, %p64
      %p67 = scmp.ne.s32.totalorder %s52, %s66
      %p68 = scmp.eq.s32.totalorder %s21, 0
      %p69 = por %p67, %p68
      %s71 = sadd.s32 %s70, 1
      %p74 = scmp.eq.s32.totalorder %s15, 1
      %p75 = scmp.ne.s32.totalorder %s70, %s72
      %p76 = scmp.eq.s32.totalorder %s15, 0
      %p77 = por %p75, %p76
      %p78 = scmp.ne.s32.totalorder %s70, %s72
      %p79 = scmp.eq.s32.totalorder %s20, 1
      %p80 = por %p78, %p79
      %p81 = scmp.ne.s32.totalorder %s72, %s73
      %p82 = scmp.eq.s32.totalorder %s20, 0
      %p83 = por %p81, %p82
      %p84 = scmp.ne.s32.totalorder %s72, %s73
      %p85 = scmp.eq.s32.totalorder %s21, 1
      %p86 = por %p84, %p85
      %p88 = scmp.ne.s32.totalorder %s73, %s87
      %p89 = scmp.eq.s32.totalorder %s21, 0
      %p90 = por %p88, %p89
      %s91 = ssub.s32 %s15, %s22
      %p92 = scmp.eq.s32.totalorder %s91, 0
      %s94 = sadd.s32 %s93, 1
      %s95 = scalar_select %p92, %s93, %s94
      %p98 = pneg %p92
      %p99 = scmp.eq.s32.totalorder %s15, 1
      %p100 = por %p98, %p99
      %p101 = scmp.ne.s32.totalorder %s93, %s96
      %p102 = scmp.eq.s32.totalorder %s15, 0
      %p103 = por %p101, %p102
      %p104 = scmp.ne.s32.totalorder %s93, %s96
      %p105 = scmp.eq.s32.totalorder %s20, 1
      %p106 = por %p104, %p105
      %p107 = scmp.ne.s32.totalorder %s96, %s97
      %p108 = scmp.eq.s32.totalorder %s20, 0
      %p109 = por %p107, %p108
      %p110 = scmp.ne.s32.totalorder %s96, %s97
      %p111 = scmp.eq.s32.totalorder %s21, 1
      %p112 = por %p110, %p111
      %p114 = scmp.ne.s32.totalorder %s97, %s113
      %p115 = scmp.eq.s32.totalorder %s21, 0
      %p116 = por %p114, %p115
      %p117 = scmp.le.s32.totalorder 1, %s15
      %p118 = scmp.lt.s32.totalorder %s15, 3
      %p119 = pnand %p117, %p118
      %p120 = pneg %p119
      // Predicated region
      $region9: #{tpu_custom_call.1} parent=5 // pred_check
        _
      $region10: #{tpu_custom_call.1} parent=5 // pred_check_branch
        %122 = sbr.rel (%p119) target = $region12
      $region11: #{tpu_custom_call.1} parent=5 // pred_region
        %s123 = ssub.s32 %s15, 1
        // Predicated region
        $region13: #{tpu_custom_call.1} parent=11 // pred_check
          %p124 = pneg %p62
        $region14: #{tpu_custom_call.1} parent=11 // pred_check_branch
          %126 = sbr.rel (%p124) target = $region16
        $region15: #{tpu_custom_call.1} parent=11 // pred_region
          _
        $region16: #{tpu_custom_call.1} parent=11 // pred_fallthru
          _
        // Predicated region
        $region17: #{tpu_custom_call.1} parent=11 // pred_check
          %p127 = pneg %p83
        $region18: #{tpu_custom_call.1} parent=11 // pred_check_branch
          %129 = sbr.rel (%p127) target = $region20
        $region19: #{tpu_custom_call.1} parent=11 // pred_region
          _
        $region20: #{tpu_custom_call.1} parent=11 // pred_fallthru
          _
      $region12: #{tpu_custom_call.1} parent=5 // pred_fallthru
        _
      %p130 = scmp.lt.s32.totalorder %s15, 2
      // Predicated region
      $region21: #{tpu_custom_call.1} parent=5 // pred_check
        %p131 = pneg %p130
      $region22: #{tpu_custom_call.1} parent=5 // pred_check_branch
        %133 = sbr.rel (%p131) target = $region24
      $region23: #{tpu_custom_call.1} parent=5 // pred_region
        // Predicated region
        $region25: #{tpu_custom_call.1} parent=23 // pred_check
          %p134 = pneg %p35
        $region26: #{tpu_custom_call.1} parent=23 // pred_check_branch
          %136 = sbr.rel (%p134) target = $region28
        $region27: #{tpu_custom_call.1} parent=23 // pred_region
          %s137 = sand.u32 %s25, 1
          %s138 = scalar_lea.sflag [#allocation3], %s137
          %s139 = sand.u32 %s25, 1
          %s140 = smul.addr %s139, 8
          %s141 = scalar_lea.vmem [#allocation2], %s140
          %143 = vsyncadd %s138, 0
          %s144 = smul.addr %s15, 2
          %s145 = smul.addr %s144, 4
          %s146 = scalar_lea.hbm %s0, %s145
          %s148 = sshll.u32 %s146, 4
          %s149 = int_to_ptr.hbm [resolvable:$true] %s148
          %s150 = sshll.u32 %s141, 4
          %s151 = int_to_ptr.vmem [resolvable:$true] %s150
          %153 = dma.hbm_to_vmem [thread:$0]  %s149, 128, %s151, %s138
        $region28: #{tpu_custom_call.1} parent=23 // pred_fallthru
          _
      $region24: #{tpu_custom_call.1} parent=5 // pred_fallthru
        _
      %p154 = scmp.le.s32.totalorder 1, %s15
      %p155 = scmp.lt.s32.totalorder %s15, 3
      %p156 = pnand %p154, %p155
      %p157 = pneg %p156
      // Predicated region
      $region29: #{tpu_custom_call.1} parent=5 // pred_check
        _
      $region30: #{tpu_custom_call.1} parent=5 // pred_check_branch
        %159 = sbr.rel (%p156) target = $region32
      $region31: #{tpu_custom_call.1} parent=5 // pred_region
        %s160 = ssub.s32 %s15, 1
        %s161 = sand.u32 %s28, 1
        %s162 = scalar_lea.sflag [#allocation3], %s161
        %s163 = sand.u32 %s28, 1
        %s164 = smul.addr %s163, 8
        %s165 = scalar_lea.vmem [#allocation2], %s164
        // Predicated region
        $region33: #{tpu_custom_call.1} parent=31 // pred_check
          %p166 = pneg %p41
        $region34: #{tpu_custom_call.1} parent=31 // pred_check_branch
          %168 = sbr.rel (%p166) target = $region36
        $region35: #{tpu_custom_call.1} parent=31 // pred_region
          %170 = dma.done %s162, 128
        $region36: #{tpu_custom_call.1} parent=31 // pred_fallthru
          _
        %s171 = sand.u32 %s28, 1
        %s172 = scalar_lea.sflag [#allocation3], %s171
        %s173 = sand.u32 %s28, 1
        %s174 = smul.addr %s173, 8
        %s175 = scalar_lea.vmem [#allocation2], %s174
        %p176 = pneg %p41
        %p177 = pneg %p38
        %p178 = pneg %p62
        %p179 = pneg %p59
        %p180 = pneg %p83
        %p181 = pneg %p80
        %p182 = pneg %p109
        %p183 = pneg %p106
        %s184 = sand.u32 %s96, 1
        %s185 = scalar_lea.sflag [#allocation4], %s184
        %s186 = sand.u32 %s96, 1
        %s187 = smul.addr %s186, 8
        %s188 = scalar_lea.vmem [#allocation5], %s187
        %v189 = vld [vmem:[%s165] sm:$0xff]
        %191 = vst [vmem:[#allocation1] ss:$2 sm:$0xff] %v189
        %v192 = vld.sshfl [vmem:[#allocation1] sm:$0xff pattern:$0x75316420]
        %v193 = vld.sshfl [vmem:[#allocation1 + $0x8] sm:$0xff pattern:$0x75316420]
        %vm196 = vcmask 1043456
        %v197 = vsel %vm196, %v192, 0.0
        %v198 = vrot.slane %v197, 4
        %v199 = vadd.f32 %v197, %v198
        %v200 = vrot.slane %v199, 2
        %v201 = vadd.f32 %v199, %v200
        %v202 = vrot.slane %v201, 1
        %v203 = vadd.f32 %v201, %v202
        %v204 = vsel %vm196, %v193, 0.0
        %v205 = vrot.slane %v204, 4
        %v206 = vadd.f32 %v204, %v205
        %v207 = vrot.slane %v206, 2
        %v208 = vadd.f32 %v206, %v207
        %v209 = vrot.slane %v208, 1
        %v210 = vadd.f32 %v208, %v209
        %v211 = vrcp.pop 4.0
        %v212 = vmul.f32 4.0, %v211
        %v213 = vsub.f32 1.0, %v212
        %v214 = vmul.f32 %v211, %v213
        %v215 = vadd.f32 %v211, %v214
        %vm216 = vweird.f32 %v211
        %v217 = vsel %vm216, %v211, %v215
        %v218 = vmul.f32 %v203, %v217
        %v219 = vmul.f32 %v210, %v217
        %v222 = vrot.slane %v219, 4
        %v223 = vsel %vm196, %v218, %v222
        %v225 = vsub.f32 %v189, %v223
        %v226 = vmul.f32 %v225, %v225
        %228 = vst [vmem:[#allocation1] ss:$2 sm:$0xff] %v226
        %v229 = vld.sshfl [vmem:[#allocation1] sm:$0xff pattern:$0x75316420]
        %v230 = vld.sshfl [vmem:[#allocation1 + $0x8] sm:$0xff pattern:$0x75316420]
        %v233 = vsel %vm196, %v229, 0.0
        %v234 = vrot.slane %v233, 4
        %v235 = vadd.f32 %v233, %v234
        %v236 = vrot.slane %v235, 2
        %v237 = vadd.f32 %v235, %v236
        %v238 = vrot.slane %v237, 1
        %v239 = vadd.f32 %v237, %v238
        %v240 = vsel %vm196, %v230, 0.0
        %v241 = vrot.slane %v240, 4
        %v242 = vadd.f32 %v240, %v241
        %v243 = vrot.slane %v242, 2
        %v244 = vadd.f32 %v242, %v243
        %v245 = vrot.slane %v244, 1
        %v246 = vadd.f32 %v244, %v245
        %v247 = vmul.f32 %v239, %v217
        %v248 = vmul.f32 %v246, %v217
        %v249 = vadd.f32 %v247, 1e-06
        %v250 = vadd.f32 %v248, 1e-06
        %v251 = vrsqrt.pop %v249
        %v252 = vmul.f32 %v251, %v249
        %v253 = vmul.f32 %v252, %v251
        %v254 = vmul.f32 0.5, %v253
        %v255 = vsub.f32 1.5, %v254
        %v256 = vmul.f32 %v251, %v255
        %vm257 = vweird.f32 %v249
        %vm258 = vweird.f32 %v251
        %vm259 = vmor %vm257, %vm258
        %v260 = vsel %vm259, %v251, %v256
        %v261 = vrsqrt.pop %v250
        %v262 = vmul.f32 %v261, %v250
        %v263 = vmul.f32 %v262, %v261
        %v264 = vmul.f32 0.5, %v263
        %v265 = vsub.f32 1.5, %v264
        %v266 = vmul.f32 %v261, %v265
        %vm267 = vweird.f32 %v250
        %vm268 = vweird.f32 %v261
        %vm269 = vmor %vm267, %vm268
        %v270 = vsel %vm269, %v261, %v266
        %v271 = vld [vmem:[%s1] sm:$0xf]
        %v272 = vld [vmem:[%s2] sm:$0xf]
        %v275 = vrot.slane %v270, 4
        %v276 = vsel %vm196, %v260, %v275
        %v278 = vmul.f32 %v225, %v276
        %280 = vset.pattern.permute.xlu0 0
        %281 = vperm.xlu0 %280, %v271
        %v282 = vpop.permute.xlu0 %281
        %v284 = vunpack.c.l.s4 839922192
        %v285 = vunpack.c.0.s8 %v284
        %v286 = vperm.slane %v282, %v285
        %v288 = vmul.f32 %v278, %v286
        %290 = vset.pattern.permute.xlu0 0
        %291 = vperm.xlu0 %290, %v272
        %v292 = vpop.permute.xlu0 %291
        %v294 = vunpack.c.l.s4 839922192
        %v295 = vunpack.c.0.s8 %v294
        %v296 = vperm.slane %v292, %v295
        %v298 = vadd.f32 %v288, %v296
        %299 = vst [vmem:[%s188] sm:$0xff] %v298
        %s300 = sand.u32 %s96, 1
        %s301 = scalar_lea.sflag [#allocation4], %s300
        %s302 = sand.u32 %s96, 1
        %s303 = smul.addr %s302, 8
        %s304 = scalar_lea.vmem [#allocation5], %s303
        // Predicated region
        $region37: #{tpu_custom_call.1} parent=31 // pred_check
          %p305 = pneg %p106
        $region38: #{tpu_custom_call.1} parent=31 // pred_check_branch
          %307 = sbr.rel (%p305) target = $region40
        $region39: #{tpu_custom_call.1} parent=31 // pred_region
          %309 = vsyncadd %s301, 0
          %s310 = smul.addr %s20, 2
          %s311 = smul.addr %s310, 4
          %s312 = scalar_lea.hbm %s3, %s311
          %s314 = sshll.u32 %s304, 4
          %s315 = int_to_ptr.vmem [resolvable:$true] %s314
          %s316 = sshll.u32 %s312, 4
          %s317 = int_to_ptr.hbm [resolvable:$true] %s316
          %319 = dma.vmem_to_hbm [thread:$0]  %s315, 128, %s317, %s301
        $region40: #{tpu_custom_call.1} parent=31 // pred_fallthru
          _
      $region32: #{tpu_custom_call.1} parent=5 // pred_fallthru
        _
      %p320 = scmp.le.s32.totalorder 2, %s15
      // Predicated region
      $region41: #{tpu_custom_call.1} parent=5 // pred_check
        %p321 = pneg %p320
      $region42: #{tpu_custom_call.1} parent=5 // pred_check_branch
        %323 = sbr.rel (%p321) target = $region44
      $region43: #{tpu_custom_call.1} parent=5 // pred_region
        %s324 = ssub.s32 %s15, 2
        // Predicated region
        $region45: #{tpu_custom_call.1} parent=43 // pred_check
          %p325 = pneg %p112
        $region46: #{tpu_custom_call.1} parent=43 // pred_check_branch
          %327 = sbr.rel (%p325) target = $region48
        $region47: #{tpu_custom_call.1} parent=43 // pred_region
          %s328 = sand.u32 %s97, 1
          %s329 = scalar_lea.sflag [#allocation4], %s328
          %s330 = sand.u32 %s97, 1
          %s331 = smul.addr %s330, 8
          %s332 = scalar_lea.vmem [#allocation5], %s331
          %334 = dma.done %s329, 128
        $region48: #{tpu_custom_call.1} parent=43 // pred_fallthru
          _
      $region44: #{tpu_custom_call.1} parent=5 // pred_fallthru
        _
    $region6: #{tpu_custom_call.1} parent=1 // loop_footer
      %s19 = sadd.s32 1, %s15
    $region7: #{tpu_custom_call.1} parent=1 // loop_footer_branch
      %14 = sbr.rel target = $region3
    $region8: #{tpu_custom_call.1} parent=1 // loop_exit
      _
    %335 = vsyncpa [#allocation3], 1
    %s336 = scalar_lea.sflag [#allocation3], 1
    %337 = vsyncpa %s336, 1
    %338 = vsyncpa [#allocation4], 1
    %s339 = scalar_lea.sflag [#allocation4], 1
    %340 = vsyncpa %s339, 1

</llo_original>
